<compile_context>
chip_gen: v5e
topology: v5e:2x2
jax: 0.10.0
libtpu: 0.0.40
codegen_flags: <defaults>
</compile_context>

<pallas_src>
import functools

import jax
import jax.numpy as jnp
from jax import lax
from jax.experimental import pallas as pl
from jax.experimental.pallas import tpu as pltpu


def _spatial_reg_loss_kernel(pred_ref, tgt_ref, out_ref, *, norm, ignore_index,
                             num_ch, hw_lanes, tile_rows, total_rows):
    """(tile_rows, num_ch*hw_lanes) native tile -> (1, 16, 128) f32 partials."""
    p = pred_ref[...]                                   # native dtype
    t = tgt_ref[...]

    # Mask from channel 0 (lanes [0, hw_lanes)), compared in the native dtype.
    mask = t[:, 0:hw_lanes] != jnp.asarray(ignore_index, t.dtype)  # (TN, HWp)

    # Row-validity mask only when the trailing block runs past N (OOB rows
    # contain garbage; exclude them from both the sum and the count).
    if total_rows % tile_rows != 0:
        row = lax.broadcasted_iota(jnp.int32, (tile_rows, 1), 0)
        valid = (pl.program_id(0) * tile_rows + row) < total_rows
        mask = jnp.logical_and(mask, valid)

    pf = p.astype(jnp.float32)
    tf = t.astype(jnp.float32)
    diff = pf - tf
    elt = jnp.abs(diff) if norm == 1 else diff * diff   # (TN, C*HWp) f32

    # Channel sum via static 128-aligned lane slices (whole-vreg selects).
    per_pos = elt[:, 0:hw_lanes]
    for c in range(1, num_ch):
        per_pos = per_pos + elt[:, c * hw_lanes:(c + 1) * hw_lanes]  # (TN, HWp)

    loss_m = jnp.where(mask, per_pos, 0.0)              # (TN, HWp)
    cnt_m = mask.astype(jnp.float32)                    # (TN, HWp)

    # Fold lanes down to 128 (128-aligned slices -> pure VPU adds).
    k = hw_lanes // 128
    s_acc = loss_m[:, 0:128]
    c_acc = cnt_m[:, 0:128]
    for j in range(1, k):
        s_acc = s_acc + loss_m[:, j * 128:(j + 1) * 128]
        c_acc = c_acc + cnt_m[:, j * 128:(j + 1) * 128]

    # Fold sublanes down to 8 (vreg-wise adds; tile_rows % 8 == 0 by design).
    s8 = jnp.sum(s_acc.reshape(tile_rows // 8, 8, 128), axis=0)   # (8, 128)
    c8 = jnp.sum(c_acc.reshape(tile_rows // 8, 8, 128), axis=0)   # (8, 128)

    out_ref[0, 0:8, :] = s8
    out_ref[0, 8:16, :] = c8


def spatial_regression_loss(prediction, target, *, norm, ignore_index=255,
                            tile_f32_bytes=2 * 1024 * 1024):
    """Pallas implementation of SpatialRegressionLoss.forward."""
    assert prediction.ndim == 5, "Must be a 5D tensor"
    if norm not in (1, 2):
        raise ValueError(f"Expected norm 1 or 2, but got norm={norm}")

    B, S, C, H, W = prediction.shape
    N, HW = B * S, H * W

    # Free bitcast reshapes; NO dtype upcast here (kernel casts after load).
    p = prediction.reshape(N, C, HW)
    t = target.reshape(N, C, HW)

    # Lane-align the spatial dim (only copies when HW % 128 != 0; the padded
    # target positions equal ignore_index so they never count).
    HWp = ((HW + 127) // 128) * 128
    if HWp != HW:
        pad = HWp - HW
        p = jnp.pad(p, ((0, 0), (0, 0), (0, pad)))
        t = jnp.pad(t, ((0, 0), (0, 0), (0, pad)),
                    constant_values=jnp.asarray(ignore_index, t.dtype))

    # Lane-dense 2-D layout: channel c lives in lanes [c*HWp, (c+1)*HWp).
    p2 = p.reshape(N, C * HWp)
    t2 = t.reshape(N, C * HWp)

    # Tile rows: ~tile_f32_bytes per input tile (f32 equivalent), multiple of 8,
    # conservative enough for v7x's 64 MiB VMEM with double buffering.
    row_f32_bytes = C * HWp * 4
    tn = max(1, tile_f32_bytes // row_f32_bytes)
    tn = min(tn, ((N + 7) // 8) * 8)
    tn = max(8, (tn // 8) * 8)
    grid = pl.cdiv(N, tn)

    kernel = functools.partial(
        _spatial_reg_loss_kernel, norm=norm, ignore_index=ignore_index,
        num_ch=C, hw_lanes=HWp, tile_rows=tn, total_rows=N)

    bytes_in = (p2.size * p2.dtype.itemsize + t2.size * t2.dtype.itemsize)
    cost = pl.CostEstimate(flops=4 * N * C * HW, transcendentals=0,
                           bytes_accessed=bytes_in + grid * 16 * 128 * 4)

    partials = pl.pallas_call(
        kernel,
        out_shape=jax.ShapeDtypeStruct((grid, 16, 128), jnp.float32),
        grid_spec=pltpu.PrefetchScalarGridSpec(
            num_scalar_prefetch=0,
            grid=(grid,),
            in_specs=[pl.BlockSpec((tn, C * HWp), lambda i: (i, 0)),
                      pl.BlockSpec((tn, C * HWp), lambda i: (i, 0))],
            out_specs=pl.BlockSpec((1, 16, 128), lambda i: (i, 0, 0)),
        ),
        compiler_params=pltpu.CompilerParams(
            dimension_semantics=("parallel",),   # per-block partials: shardable
            vmem_limit_bytes=32 * 1024 * 1024),
        cost_estimate=cost,
    )(p2, t2)

    loss_sum = jnp.sum(partials[:, 0:8, :])
    count = jnp.sum(partials[:, 8:16, :])
    # if mask.sum() == 0 -> 0.0, else masked mean.
    return jnp.where(count > 0, loss_sum / jnp.maximum(count, 1.0),
                     jnp.float32(0.0))


def _reference(prediction, target, *, norm, ignore_index=255):
    """Pure-JAX reference mirroring the PyTorch forward."""
    mask = target[:, :, :1] != ignore_index                    # (B,S,1,H,W)
    if norm == 1:
        l = jnp.abs(prediction - target)
    else:
        l = (prediction - target) ** 2
    l = jnp.sum(l, axis=-3, keepdims=True)                     # (B,S,1,H,W)
    cnt = jnp.sum(mask)
    masked_sum = jnp.sum(jnp.where(mask, l, 0.0))
    return jnp.where(cnt > 0, masked_sum / jnp.maximum(cnt, 1), 0.0)


if __name__ == "__main__":
    key = jax.random.PRNGKey(0)
    k1, k2, k3 = jax.random.split(key, 3)

    # Small shapes consistent with the 5D (batch, seq, channels, H, W) input.
    B, S, C, H, W = 2, 3, 4, 16, 16
    IGNORE = 255

    pred = jax.random.normal(k1, (B, S, C, H, W), jnp.float32)
    tgt = jax.random.normal(k2, (B, S, C, H, W), jnp.float32)
    # Mark ~25% of spatial positions as ignored via channel 0 of the target.
    ign = jax.random.bernoulli(k3, 0.25, (B, S, 1, H, W))
    tgt = tgt.at[:, :, 0:1].set(
        jnp.where(ign, jnp.float32(IGNORE), tgt[:, :, 0:1]))

    ok = True
    for norm in (1, 2):
        out = jax.block_until_ready(
            spatial_regression_loss(pred, tgt, norm=norm, ignore_index=IGNORE))
        ref = jax.block_until_ready(
            _reference(pred, tgt, norm=norm, ignore_index=IGNORE))
        if not jnp.allclose(out, ref, rtol=1e-5, atol=1e-5):
            ok = False
            print(f"MISMATCH norm={norm}: kernel={out} ref={ref}")

    # bf16 inputs stream natively over HBM (no wrapper upcast).
    out_bf16 = jax.block_until_ready(
        spatial_regression_loss(pred.astype(jnp.bfloat16),
                                tgt.astype(jnp.bfloat16),
                                norm=2, ignore_index=IGNORE))
    ref_bf16 = jax.block_until_ready(
        _reference(pred.astype(jnp.bfloat16).astype(jnp.float32),
                   tgt.astype(jnp.bfloat16).astype(jnp.float32),
                   norm=2, ignore_index=IGNORE))
    if not jnp.allclose(out_bf16, ref_bf16, rtol=2e-2, atol=2e-2):
        ok = False
        print(f"MISMATCH bf16 path: kernel={out_bf16} ref={ref_bf16}")

    # Also check the all-ignored path returns exactly 0.0.
    tgt_all_ign = tgt.at[:, :, 0:1].set(jnp.float32(IGNORE))
    zero_out = jax.block_until_ready(
        spatial_regression_loss(pred, tgt_all_ign, norm=2, ignore_index=IGNORE))
    if not jnp.allclose(zero_out, 0.0):
        ok = False
        print(f"MISMATCH all-ignored path: {zero_out}")

    if ok:
        print("KERNEL_OK")
</pallas_src>

<mosaic_0001>
module attributes {stable_mosaic.version = 11 : i64} {
  func.func @_spatial_reg_loss_kernel(%arg0: i32, %arg1: memref<8x1024xf32, #tpu.memory_space<vmem>>, %arg2: memref<8x1024xf32, #tpu.memory_space<vmem>>, %arg3: memref<1x16x128xf32, #tpu.memory_space<vmem>>) attributes {dimension_semantics = [#tpu.dimension_semantics<parallel>], iteration_bounds = array<i64: 1>, scalar_prefetch = 0 : i64, scratch_operands = 0 : i64, tpu.core_type = #tpu.core_type<tc>, window_params = [{transform_indices = @transform_0, window_bounds = array<i64: 8, 1024>}, {transform_indices = @transform_1, window_bounds = array<i64: 8, 1024>}, {transform_indices = @transform_2, window_bounds = array<i64: 1, 16, 128>}]} {
    %c0 = arith.constant 0 : index
    %c0_0 = arith.constant 0 : index
    %0 = vector.load %arg1[%c0, %c0_0] : memref<8x1024xf32, #tpu.memory_space<vmem>>, vector<8x1024xf32>
    %c0_1 = arith.constant 0 : index
    %c0_2 = arith.constant 0 : index
    %1 = vector.load %arg2[%c0_1, %c0_2] : memref<8x1024xf32, #tpu.memory_space<vmem>>, vector<8x1024xf32>
    %2 = vector.extract_strided_slice %1 {offsets = [0, 0], sizes = [8, 256], strides = [1, 1]} : vector<8x1024xf32> to vector<8x256xf32>
    %cst = arith.constant 2.550000e+02 : f32
    %3 = vector.broadcast %cst : f32 to vector<8x256xf32>
    %4 = arith.cmpf one, %2, %3 : vector<8x256xf32>
    %5 = tpu.iota {dimensions = array<i32: 0>} : vector<8x1xi32>
    %c8_i32 = arith.constant 8 : i32
    %6 = arith.muli %arg0, %c8_i32 : i32
    %7 = vector.broadcast %6 : i32 to vector<8x1xi32>
    %8 = arith.addi %7, %5 : vector<8x1xi32>
    %c6_i32 = arith.constant 6 : i32
    %9 = vector.broadcast %c6_i32 : i32 to vector<8x1xi32>
    %10 = arith.cmpi slt, %8, %9 : vector<8x1xi32>
    %11 = vector.broadcast %10 : vector<8x1xi1> to vector<8x256xi1>
    %12 = arith.andi %4, %11 : vector<8x256xi1>
    %13 = arith.subf %0, %1 : vector<8x1024xf32>
    %14 = math.absf %13 : vector<8x1024xf32>
    %15 = vector.extract_strided_slice %14 {offsets = [0, 0], sizes = [8, 256], strides = [1, 1]} : vector<8x1024xf32> to vector<8x256xf32>
    %16 = vector.extract_strided_slice %14 {offsets = [0, 256], sizes = [8, 256], strides = [1, 1]} : vector<8x1024xf32> to vector<8x256xf32>
    %17 = arith.addf %15, %16 : vector<8x256xf32>
    %18 = vector.extract_strided_slice %14 {offsets = [0, 512], sizes = [8, 256], strides = [1, 1]} : vector<8x1024xf32> to vector<8x256xf32>
    %19 = arith.addf %17, %18 : vector<8x256xf32>
    %20 = vector.extract_strided_slice %14 {offsets = [0, 768], sizes = [8, 256], strides = [1, 1]} : vector<8x1024xf32> to vector<8x256xf32>
    %21 = arith.addf %19, %20 : vector<8x256xf32>
    %cst_3 = arith.constant 0.000000e+00 : f32
    %22 = vector.broadcast %cst_3 : f32 to vector<8x256xf32>
    %23 = arith.select %12, %21, %22 : vector<8x256xi1>, vector<8x256xf32>
    %24 = arith.extui %12 : vector<8x256xi1> to vector<8x256xi32>
    %25 = arith.sitofp %24 : vector<8x256xi32> to vector<8x256xf32>
    %26 = vector.extract_strided_slice %23 {offsets = [0, 0], sizes = [8, 128], strides = [1, 1]} : vector<8x256xf32> to vector<8x128xf32>
    %27 = vector.extract_strided_slice %25 {offsets = [0, 0], sizes = [8, 128], strides = [1, 1]} : vector<8x256xf32> to vector<8x128xf32>
    %28 = vector.extract_strided_slice %23 {offsets = [0, 128], sizes = [8, 128], strides = [1, 1]} : vector<8x256xf32> to vector<8x128xf32>
    %29 = arith.addf %26, %28 : vector<8x128xf32>
    %30 = vector.extract_strided_slice %25 {offsets = [0, 128], sizes = [8, 128], strides = [1, 1]} : vector<8x256xf32> to vector<8x128xf32>
    %31 = arith.addf %27, %30 : vector<8x128xf32>
    %32 = vector.shape_cast %29 : vector<8x128xf32> to vector<1x8x128xf32>
    %cst_4 = arith.constant dense<0.000000e+00> : vector<8x128xf32>
    %33 = vector.multi_reduction <add>, %32, %cst_4 [0] : vector<1x8x128xf32> to vector<8x128xf32>
    %34 = vector.shape_cast %31 : vector<8x128xf32> to vector<1x8x128xf32>
    %cst_5 = arith.constant dense<0.000000e+00> : vector<8x128xf32>
    %35 = vector.multi_reduction <add>, %34, %cst_5 [0] : vector<1x8x128xf32> to vector<8x128xf32>
    %c0_6 = arith.constant 0 : index
    %c0_7 = arith.constant 0 : index
    %c0_8 = arith.constant 0 : index
    %36 = vector.load %arg3[%c0_6, %c0_7, %c0_8] : memref<1x16x128xf32, #tpu.memory_space<vmem>>, vector<1x8x128xf32>
    %37 = vector.shape_cast %36 : vector<1x8x128xf32> to vector<8x128xf32>
    %38 = vector.shape_cast %33 : vector<8x128xf32> to vector<1x8x128xf32>
    tpu.vector_store %arg3[%c0_6, %c0_7, %c0_8], %38 {strides = array<i32>} : memref<1x16x128xf32, #tpu.memory_space<vmem>>, vector<1x8x128xf32>,
    %c0_9 = arith.constant 0 : index
    %c8 = arith.constant 8 : index
    %c0_10 = arith.constant 0 : index
    %39 = vector.load %arg3[%c0_9, %c8, %c0_10] : memref<1x16x128xf32, #tpu.memory_space<vmem>>, vector<1x8x128xf32>
    %40 = vector.shape_cast %39 : vector<1x8x128xf32> to vector<8x128xf32>
    %41 = vector.shape_cast %35 : vector<8x128xf32> to vector<1x8x128xf32>
    tpu.vector_store %arg3[%c0_9, %c8, %c0_10], %41 {strides = array<i32>} : memref<1x16x128xf32, #tpu.memory_space<vmem>>, vector<1x8x128xf32>,
    return
  }
  func.func @transform_0(%arg0: i32) -> (i32, i32) {
    %c0_i32 = arith.constant 0 : i32
    %c0_i32_0 = arith.constant 0 : i32
    return %arg0, %c0_i32 : i32, i32
  }
  func.func @transform_1(%arg0: i32) -> (i32, i32) {
    %c0_i32 = arith.constant 0 : i32
    %c0_i32_0 = arith.constant 0 : i32
    return %arg0, %c0_i32 : i32, i32
  }
  func.func @transform_2(%arg0: i32) -> (i32, i32, i32) {
    %c0_i32 = arith.constant 0 : i32
    %c0_i32_0 = arith.constant 0 : i32
    %c0_i32_1 = arith.constant 0 : i32
    return %arg0, %c0_i32, %c0_i32_0 : i32, i32, i32
  }
}

</mosaic_0001>

<llo_original>
// kernel: tpu_custom_call.1
$region0: #{tpu_custom_call.1}
  #allocation0 [shape = 'u32[]', space=smem, size = 0x4, offset = 0x4, fixed_abs, tag = 'smem constant byte address 0x4 - core index']
  #allocation1 [shape = 'u32[72,128]{1,0:T(1,128)}', space=vmem, size = 0x9000, scoped, tag = 'internal scratch']
  %s0 = inlined_call_operand.hbm [shape: f32[6,1024], index: 0, kind: input, shape index: {}]
  %s1 = inlined_call_operand.hbm [shape: f32[6,1024], index: 1, kind: input, shape index: {}]
  %s2 = inlined_call_operand.hbm [shape: f32[1,16,128], index: 2, kind: output, shape index: {}]
  %s3 = sld [smem:[#allocation0]]
  $region26: #{tpu_custom_call.1} parent=0
    _
  %s5 = ssub.s32 1, %s3
  %s6 = scalar_select 0, %s5, %s3
  $region1: #{tpu_custom_call.1} parent=0
    #allocation2 [shape = 'u8[32768]{0}', space=vmem, size = 0x8000, scoped, tag = 'input window, operand 0, single buffered']
    #allocation3 [shape = 's32[1]{0}', space=sflag, size = 0x4, scoped, tag = 'scoped memory for tpu_custom_call.1']
    #allocation4 [shape = 's32[1]{0}', space=sflag, size = 0x4, scoped, tag = 'scoped memory for tpu_custom_call.1']
    #allocation5 [shape = 'u8[32768]{0}', space=vmem, size = 0x8000, scoped, tag = 'input window, operand 1, single buffered']
    #allocation6 [shape = 's32[1]{0}', space=sflag, size = 0x4, scoped, tag = 'scoped memory for tpu_custom_call.1']
    #allocation7 [shape = 'u8[8192]{0}', space=vmem, size = 0x2000, scoped, tag = 'output window, operand 0, single buffered']
    %7 = vsyncpa [#allocation3], 0
    %8 = vsyncpa [#allocation6], 0
    %9 = vsyncpa [#allocation4], 0
    // Predicated region
    $region2: #{tpu_custom_call.1} parent=1 // pred_check
      _
    $region3: #{tpu_custom_call.1} parent=1 // pred_check_branch
      %11 = sbr.rel (0) target = $region5
    $region4: #{tpu_custom_call.1} parent=1 // pred_region
      %13 = vsyncadd [#allocation3], 0
      %s15 = sshll.u32 %s0, 4
      %s16 = int_to_ptr.hbm [resolvable:$true] %s15
      %s17 = sshll.u32 [#allocation2], 4
      %s18 = int_to_ptr.vmem [resolvable:$true] %s17
      %20 = dma.hbm_to_vmem [thread:$0]  %s16, 1024, %s18, [#allocation3]
    $region5: #{tpu_custom_call.1} parent=1 // pred_fallthru
      _
    // Predicated region
    $region6: #{tpu_custom_call.1} parent=1 // pred_check
      _
    $region7: #{tpu_custom_call.1} parent=1 // pred_check_branch
      %22 = sbr.rel (0) target = $region9
    $region8: #{tpu_custom_call.1} parent=1 // pred_region
      %24 = vsyncadd [#allocation6], 0
      %s26 = sshll.u32 %s1, 4
      %s27 = int_to_ptr.hbm [resolvable:$true] %s26
      %s28 = sshll.u32 [#allocation5], 4
      %s29 = int_to_ptr.vmem [resolvable:$true] %s28
      %31 = dma.hbm_to_vmem [thread:$0]  %s27, 1024, %s29, [#allocation6]
    $region9: #{tpu_custom_call.1} parent=1 // pred_fallthru
      _
    // Predicated region
    $region10: #{tpu_custom_call.1} parent=1 // pred_check
      _
    $region11: #{tpu_custom_call.1} parent=1 // pred_check_branch
      %33 = sbr.rel (0) target = $region13
    $region12: #{tpu_custom_call.1} parent=1 // pred_region
      %35 = dma.done [#allocation3], 1024
    $region13: #{tpu_custom_call.1} parent=1 // pred_fallthru
      _
    // Predicated region
    $region14: #{tpu_custom_call.1} parent=1 // pred_check
      _
    $region15: #{tpu_custom_call.1} parent=1 // pred_check_branch
      %37 = sbr.rel (0) target = $region17
    $region16: #{tpu_custom_call.1} parent=1 // pred_region
      %39 = dma.done [#allocation6], 1024
    $region17: #{tpu_custom_call.1} parent=1 // pred_fallthru
      _
    %v40 = vld [vmem:[#allocation2] sm:$0xff]
    %v41 = vld [vmem:[#allocation2 + $0x8] sm:$0xff]
    %v42 = vld [vmem:[#allocation2 + $0x10] sm:$0xff]
    %v43 = vld [vmem:[#allocation2 + $0x18] sm:$0xff]
    %v44 = vld [vmem:[#allocation2 + $0x20] sm:$0xff]
    %v45 = vld [vmem:[#allocation2 + $0x28] sm:$0xff]
    %v46 = vld [vmem:[#allocation2 + $0x30] sm:$0xff]
    %v47 = vld [vmem:[#allocation2 + $0x38] sm:$0xff]
    %v48 = vld [vmem:[#allocation5] sm:$0xff]
    %v49 = vld [vmem:[#allocation5 + $0x8] sm:$0xff]
    %v50 = vld [vmem:[#allocation5 + $0x10] sm:$0xff]
    %v51 = vld [vmem:[#allocation5 + $0x18] sm:$0xff]
    %v52 = vld [vmem:[#allocation5 + $0x20] sm:$0xff]
    %v53 = vld [vmem:[#allocation5 + $0x28] sm:$0xff]
    %v54 = vld [vmem:[#allocation5 + $0x30] sm:$0xff]
    %v55 = vld [vmem:[#allocation5 + $0x38] sm:$0xff]
    %vm56 = vcmp.ne.f32.partialorder %v48, 255.0
    %vm57 = vcmp.ne.f32.partialorder %v49, 255.0
    %v58 = vlaneseq
    %v59 = vshrl.u32 %v58, 7
    %s60 = smul.u32 0, 8
    %v61 = vstv %s60
    %v62 = vadd.s32 %v61, %v59
    %vm63 = vcmp.lt.s32.totalorder %v62, 6
    %v64 = vsel %vm63, 1, 0
    %vm65 = vcmp.eq.s32.totalorder %v64, 1
    %vm66 = vmand %vm56, %vm65
    %vm67 = vmand %vm57, %vm65
    %v68 = vsub.f32 %v40, %v48
    %v69 = vsub.f32 %v41, %v49
    %v70 = vsub.f32 %v42, %v50
    %v71 = vsub.f32 %v43, %v51
    %v72 = vsub.f32 %v44, %v52
    %v73 = vsub.f32 %v45, %v53
    %v74 = vsub.f32 %v46, %v54
    %v75 = vsub.f32 %v47, %v55
    %v76 = vand.u32 2147483647, %v68
    %v77 = vand.u32 2147483647, %v69
    %v78 = vand.u32 2147483647, %v70
    %v79 = vand.u32 2147483647, %v71
    %v80 = vand.u32 2147483647, %v72
    %v81 = vand.u32 2147483647, %v73
    %v82 = vand.u32 2147483647, %v74
    %v83 = vand.u32 2147483647, %v75
    %v84 = vadd.f32 %v76, %v78
    %v85 = vadd.f32 %v77, %v79
    %v86 = vadd.f32 %v84, %v80
    %v87 = vadd.f32 %v85, %v81
    %v88 = vadd.f32 %v86, %v82
    %v89 = vadd.f32 %v87, %v83
    %v90 = vsel %vm66, %v88, 0.0
    %v91 = vsel %vm67, %v89, 0.0
    %v92 = vsel %vm66, 1, 0
    %v93 = vsel %vm67, 1, 0
    %v94 = vcvt.s32.f32 %v92
    %v95 = vcvt.s32.f32 %v93
    %v96 = vadd.f32 %v90, %v91
    %v97 = vadd.f32 %v94, %v95
    %v98 = vadd.f32 %v96, 0.0
    %v99 = vadd.f32 %v97, 0.0
    %100 = vst [vmem:[#allocation7] sm:$0xff] %v98
    %101 = vst [vmem:[#allocation7 + $0x8] sm:$0xff] %v99
    // Predicated region
    $region18: #{tpu_custom_call.1} parent=1 // pred_check
      _
    $region19: #{tpu_custom_call.1} parent=1 // pred_check_branch
      %103 = sbr.rel (0) target = $region21
    $region20: #{tpu_custom_call.1} parent=1 // pred_region
      %105 = vsyncadd [#allocation4], 0
      %s106 = sshll.u32 [#allocation7], 4
      %s107 = int_to_ptr.vmem [resolvable:$true] %s106
      %s108 = sshll.u32 %s2, 4
      %s109 = int_to_ptr.hbm [resolvable:$true] %s108
      %114 = dma.vmem_to_hbm [thread:$0]  %s107, 256, %s109, [#allocation4], 128, 128, 8
    $region21: #{tpu_custom_call.1} parent=1 // pred_fallthru
      _
    // Predicated region
    $region22: #{tpu_custom_call.1} parent=1 // pred_check
      _
    $region23: #{tpu_custom_call.1} parent=1 // pred_check_branch
      %116 = sbr.rel (0) target = $region25
    $region24: #{tpu_custom_call.1} parent=1 // pred_region
      %118 = dma.done [#allocation4], 256
    $region25: #{tpu_custom_call.1} parent=1 // pred_fallthru
      _
    %119 = vsyncpa [#allocation3], 1
    %120 = vsyncpa [#allocation6], 1
    %121 = vsyncpa [#allocation4], 1

</llo_original>
